<compile_context>
chip_gen: v7x
topology: tpu7x:2x2x1
jax: 0.10.0
libtpu: 0.0.40
codegen_flags: <defaults>
</compile_context>

<pallas_src>
import jax
import jax.numpy as jnp
from jax import lax
from jax.experimental import pallas as pl
from jax.experimental.pallas import tpu as pltpu


_MIN_BLOCK_B = 1024          # floor so per-step overhead stays hidden under the DMA
_VMEM_CAP_BYTES = 48 << 20   # leaves headroom under v7x's 64 MiB physical VMEM


# ----------------------------------------------------------------------------- kernels


def _matvec_bias_kernel(x_ref, w_ref, b_ref, o_ref):
    """Regression head for regressor_output == 1 (the default config).

    x_ref: [TB, F] VMEM tile of the flattened latent (pipelined over the batch grid)
    w_ref: [1, F]  VMEM, weight in its native nn.Linear layout (lane-dense, resident)
    b_ref: [1]     SMEM scalar bias
    o_ref: [TB, 1] VMEM output tile

    VPU multiply + VPU lane-group fold + one XLU lane reduce; f32 accumulation.
    """
    x = x_ref[...].astype(jnp.float32)                       # upcast in-kernel (v5e-safe)
    w = w_ref[...].astype(jnp.float32)                       # [1, F] broadcasts over rows
    xw = x * w                                                # [TB, F]   (VPU)
    f = xw.shape[-1]
    if f > 128 and f % 128 == 0:
        # Fold the 128-lane groups with VPU adds (vreg-aligned slices, no relayout),
        # then a single cross-lane XLU reduce over 128 lanes.
        folded = xw[:, 0:128]
        for c in range(1, f // 128):
            folded = folded + xw[:, c * 128:(c + 1) * 128]
        acc = jnp.sum(folded, axis=-1, keepdims=True)         # [TB, 1]  (XLU)
    else:
        acc = jnp.sum(xw, axis=-1, keepdims=True)
    o_ref[...] = (acc + b_ref[0]).astype(o_ref.dtype)         # scalar bias from SMEM


def _linear_bias_kernel(x_ref, w_ref, b_ref, o_ref):
    """General head for regressor_output > 1 (softlabel / binary style configs).

    x_ref: [TB, F], w_ref: [O, F] (native layout, contracted as trans_b on the MXU),
    b_ref: [1, O] VMEM, o_ref: [TB, O].
    """
    acc = lax.dot_general(
        x_ref[...], w_ref[...],
        dimension_numbers=(((1,), (1,)), ((), ())),            # contract F with F
        preferred_element_type=jnp.float32,
    )
    o_ref[...] = (acc + b_ref[...].astype(jnp.float32)).astype(o_ref.dtype)


# ----------------------------------------------------------------------------- wrappers


def _vmem_budget_bytes(tb, F, O, x_itemsize):
    """Rough scoped-VMEM budget for one grid step (double-buffered x + intermediates)."""
    x_buf = 2 * tb * F * x_itemsize                 # double-buffered x tiles
    interm = tb * F * 4                             # f32 x*w intermediate (worst case)
    out_buf = 2 * tb * max(O, 128) * 4              # lane-padded output tiles
    w_buf = 2 * max(O, 8) * ((F + 127) // 128 * 128) * 4
    return x_buf + interm + out_buf + w_buf + (2 << 20)


def _choose_batch_tile(B, F, O, x_itemsize, block_b):
    tb = min(B, max(int(block_b), _MIN_BLOCK_B))
    # Shrink until the estimated VMEM budget fits under the cap (v7x-safe).
    while tb > _MIN_BLOCK_B and _vmem_budget_bytes(tb, F, O, x_itemsize) > _VMEM_CAP_BYTES:
        tb = max(_MIN_BLOCK_B, tb // 2)
    if tb < B:
        tb = max(8, (tb // 8) * 8)                  # sublane alignment for partial blocks
    grid_b = pl.cdiv(B, tb)
    return tb, grid_b


def _regression_head_pallas(latent, weight, bias, block_b):
    B, F = latent.shape
    O = weight.shape[0]
    x_itemsize = jnp.dtype(latent.dtype).itemsize
    tb, grid_b = _choose_batch_tile(B, F, O, x_itemsize, block_b)

    # Batch tiles are independent -> "parallel" shards the grid across v7x's 2 TCs
    # (harmless on v5e/v6e).  Explicit VMEM limit so larger tiles compile everywhere.
    cparams = pltpu.CompilerParams(
        dimension_semantics=("parallel",),
        vmem_limit_bytes=_VMEM_CAP_BYTES,
    )
    cost = pl.CostEstimate(
        flops=2 * B * F * O,
        transcendentals=0,
        bytes_accessed=B * F * x_itemsize + B * O * 4
        + O * F * jnp.dtype(weight.dtype).itemsize,
    )

    if O == 1:
        out = pl.pallas_call(
            _matvec_bias_kernel,
            out_shape=jax.ShapeDtypeStruct((B, 1), jnp.float32),
            grid_spec=pltpu.PrefetchScalarGridSpec(
                num_scalar_prefetch=0,
                grid=(grid_b,),
                in_specs=[
                    pl.BlockSpec((tb, F), lambda i: (i, 0)),            # x: pipelined
                    pl.BlockSpec((1, F), lambda i: (0, 0)),             # w: resident
                    pl.BlockSpec(memory_space=pltpu.MemorySpace.SMEM),  # bias scalar
                ],
                out_specs=pl.BlockSpec((tb, 1), lambda i: (i, 0)),
            ),
            compiler_params=cparams,
            cost_estimate=cost,
        )(latent, weight, bias.reshape(1).astype(jnp.float32))
    else:
        out = pl.pallas_call(
            _linear_bias_kernel,
            out_shape=jax.ShapeDtypeStruct((B, O), jnp.float32),
            grid_spec=pltpu.PrefetchScalarGridSpec(
                num_scalar_prefetch=0,
                grid=(grid_b,),
                in_specs=[
                    pl.BlockSpec((tb, F), lambda i: (i, 0)),
                    pl.BlockSpec((O, F), lambda i: (0, 0)),
                    pl.BlockSpec((1, O), lambda i: (0, 0)),
                ],
                out_specs=pl.BlockSpec((tb, O), lambda i: (i, 0)),
            ),
            compiler_params=cparams,
            cost_estimate=cost,
        )(latent, weight, bias.reshape(1, O).astype(jnp.float32))

    return out


def pt_regression_forward(x, weight, bias, return_latent=False, *,
                          block_b=4096, min_pallas_batch=_MIN_BLOCK_B,
                          force_pallas=False):
    """Forward pass of PTRegressionModel (continuous / softlabel / binary heads).

    x      : [B, C, H, W] (NCHW like PyTorch); f32 or bf16 (bf16 halves the HBM
             stream; accumulation is f32 in-kernel on all generations)
    weight : [O, F] float (PyTorch nn.Linear weight layout, NOT transposed)
    bias   : [O]   float
    Output is float32 (differs from dtype-preserving nn.Linear for bf16 inputs).
    """
    B = x.shape[0]
    latent = x.reshape(B, -1)                    # nn.Flatten(): row-major flatten of C,H,W
    F = latent.shape[1]
    O, F_w = weight.shape
    if F != F_w:
        raise Exception(
            "The encoder and the regressor_input are mis-matched.  The regressor "
            "input should be " + str(F) + " and not " + str(F_w)
        )

    if force_pallas or B >= min_pallas_batch:
        out = _regression_head_pallas(latent, weight, bias, block_b)
    else:
        # Tiny-batch fast path: pallas_call fixed overhead dwarfs a ~2K-FLOP matvec.
        out = (latent.astype(jnp.float32) @ weight.T.astype(jnp.float32)
               + bias.astype(jnp.float32))

    return (out, latent) if return_latent else out


def init_params(key, in_features=512, out_features=1):
    # Deterministic init mimicking nn.Linear: U(-1/sqrt(in), 1/sqrt(in))
    kw, kb = jax.random.split(key)
    bound = 1.0 / jnp.sqrt(jnp.float32(in_features))
    weight = jax.random.uniform(
        kw, (out_features, in_features), jnp.float32, -bound, bound
    )
    bias = jax.random.uniform(kb, (out_features,), jnp.float32, -bound, bound)
    return weight, bias


# ----------------------------------------------------------------------------- demo


if __name__ == "__main__":
    key = jax.random.PRNGKey(0)
    k_x, k_p, k_x2, k_p2 = jax.random.split(key, 4)

    # Small shapes consistent with regressor_input=512: 2 * 16 * 16 = 512
    B, C, H, W = 2, 2, 16, 16
    F = C * H * W
    x = jax.random.normal(k_x, (B, C, H, W), dtype=jnp.float32)
    weight, bias = init_params(k_p, in_features=F, out_features=1)

    def ref_linear(lat, w, b):
        return (jnp.dot(lat.astype(jnp.float32), w.T.astype(jnp.float32),
                        precision=lax.Precision.HIGHEST) + b.astype(jnp.float32))

    # 1) Default config (continuous, O=1), tiny batch forced through the Pallas
    #    VPU/XLU matvec kernel for a correctness check (also exercises return_latent).
    out, lat = pt_regression_forward(x, weight, bias, return_latent=True,
                                     force_pallas=True)
    out = jax.block_until_ready(out)
    ref = ref_linear(x.reshape(B, -1), weight, bias)
    assert out.shape == (B, 1) and lat.shape == (B, F)
    assert jnp.allclose(out, ref, atol=1e-4, rtol=1e-4)

    # 2) Ragged multi-tile pipelined grid (grid=3, partial last tile), f32 stream.
    B2 = 2500
    x2 = jax.random.normal(k_x2, (B2, C, H, W), dtype=jnp.float32)
    out2 = jax.block_until_ready(pt_regression_forward(x2, weight, bias, block_b=1024))
    ref2 = ref_linear(x2.reshape(B2, -1), weight, bias)
    assert out2.shape == (B2, 1)
    assert jnp.allclose(out2, ref2, atol=1e-3, rtol=1e-3)

    # 3) Same batch streamed as bf16 (halves HBM reads; f32 accumulation in-kernel).
    out3 = jax.block_until_ready(
        pt_regression_forward(x2.astype(jnp.bfloat16), weight, bias, block_b=1024))
    ref3 = ref_linear(x2.reshape(B2, -1).astype(jnp.bfloat16), weight, bias)
    assert out3.shape == (B2, 1)
    assert jnp.allclose(out3, ref3, atol=2e-3, rtol=2e-3)

    # 4) Multi-output regression head (e.g. output_style='softlabel'), MXU kernel.
    O4 = 8
    w4, b4 = init_params(k_p2, in_features=F, out_features=O4)
    out4 = jax.block_until_ready(pt_regression_forward(x, w4, b4, force_pallas=True))
    ref4 = ref_linear(x.reshape(B, -1), w4, b4)
    assert out4.shape == (B, O4)
    assert jnp.allclose(out4, ref4, atol=1e-4, rtol=1e-4)

    print("KERNEL_OK")
</pallas_src>

<mosaic_0001>
module attributes {stable_mosaic.version = 11 : i64} {
  func.func @_matvec_bias_kernel(%arg0: i32, %arg1: memref<2x512xf32, #tpu.memory_space<vmem>>, %arg2: memref<1x512xf32, #tpu.memory_space<vmem>>, %arg3: memref<1xf32, #tpu.memory_space<smem>>, %arg4: memref<2x1xf32, #tpu.memory_space<vmem>>) attributes {dimension_semantics = [#tpu.dimension_semantics<parallel>], iteration_bounds = array<i64: 1>, scalar_prefetch = 0 : i64, scratch_operands = 0 : i64, tpu.core_type = #tpu.core_type<tc>, window_params = [{transform_indices = @transform_0, window_bounds = array<i64: 2, 512>}, {pipeline_mode = #tpu.pipeline_mode<synchronous>, transform_indices = @transform_1, window_bounds = array<i64: 1, 512>}, {transform_indices = @transform_2, window_bounds = array<i64: 1>}, {transform_indices = @transform_3, window_bounds = array<i64: 2, 1>}]} {
    %c0 = arith.constant 0 : index
    %c0_0 = arith.constant 0 : index
    %0 = vector.load %arg1[%c0, %c0_0] : memref<2x512xf32, #tpu.memory_space<vmem>>, vector<2x512xf32>
    %c0_1 = arith.constant 0 : index
    %c0_2 = arith.constant 0 : index
    %1 = vector.load %arg2[%c0_1, %c0_2] : memref<1x512xf32, #tpu.memory_space<vmem>>, vector<1x512xf32>
    %2 = vector.broadcast %1 : vector<1x512xf32> to vector<2x512xf32>
    %3 = arith.mulf %0, %2 : vector<2x512xf32>
    %4 = vector.extract_strided_slice %3 {offsets = [0, 0], sizes = [2, 128], strides = [1, 1]} : vector<2x512xf32> to vector<2x128xf32>
    %5 = vector.extract_strided_slice %3 {offsets = [0, 128], sizes = [2, 128], strides = [1, 1]} : vector<2x512xf32> to vector<2x128xf32>
    %6 = arith.addf %4, %5 : vector<2x128xf32>
    %7 = vector.extract_strided_slice %3 {offsets = [0, 256], sizes = [2, 128], strides = [1, 1]} : vector<2x512xf32> to vector<2x128xf32>
    %8 = arith.addf %6, %7 : vector<2x128xf32>
    %9 = vector.extract_strided_slice %3 {offsets = [0, 384], sizes = [2, 128], strides = [1, 1]} : vector<2x512xf32> to vector<2x128xf32>
    %10 = arith.addf %8, %9 : vector<2x128xf32>
    %cst = arith.constant dense<0.000000e+00> : vector<2xf32>
    %11 = vector.multi_reduction <add>, %10, %cst [1] : vector<2x128xf32> to vector<2xf32>
    %12 = vector.shape_cast %11 : vector<2xf32> to vector<2x1xf32>
    %c0_3 = arith.constant 0 : index
    %13 = memref.load %arg3[%c0_3] : memref<1xf32, #tpu.memory_space<smem>>
    %14 = vector.broadcast %13 : f32 to vector<2x1xf32>
    %15 = arith.addf %12, %14 : vector<2x1xf32>
    %c0_4 = arith.constant 0 : index
    %c0_5 = arith.constant 0 : index
    %16 = vector.load %arg4[%c0_4, %c0_5] : memref<2x1xf32, #tpu.memory_space<vmem>>, vector<2x1xf32>
    tpu.vector_store %arg4[%c0_4, %c0_5], %15 {strides = array<i32>} : memref<2x1xf32, #tpu.memory_space<vmem>>, vector<2x1xf32>,
    return
  }
  func.func @transform_0(%arg0: i32) -> (i32, i32) {
    %c0_i32 = arith.constant 0 : i32
    %c0_i32_0 = arith.constant 0 : i32
    return %arg0, %c0_i32 : i32, i32
  }
  func.func @transform_1(%arg0: i32) -> (i32, i32) {
    %c0_i32 = arith.constant 0 : i32
    %c0_i32_0 = arith.constant 0 : i32
    %c0_i32_1 = arith.constant 0 : i32
    return %c0_i32, %c0_i32_0 : i32, i32
  }
  func.func @transform_2(%arg0: i32) -> i32 {
    %c0_i32 = arith.constant 0 : i32
    %c0_i32_0 = arith.constant 0 : i32
    return %c0_i32 : i32
  }
  func.func @transform_3(%arg0: i32) -> (i32, i32) {
    %c0_i32 = arith.constant 0 : i32
    %c0_i32_0 = arith.constant 0 : i32
    return %arg0, %c0_i32 : i32, i32
  }
}

</mosaic_0001>

<llo_original>
// kernel: tpu_custom_call.1
$region0: #{tpu_custom_call.1}
  #allocation0 [shape = 'u32[]', space=smem, size = 0x4, offset = 0x4, fixed_abs, tag = 'smem constant byte address 0x4 - core index']
  #allocation1 [shape = 'u32[144,128]{1,0:T(1,128)}', space=vmem, size = 0x12000, scoped, tag = 'internal scratch']
  #allocation2 [shape = 'f32[1]{0:T(128)S(6)}', space=smem, size = 0x200, scoped, tag = 'scoped memory for tpu_custom_call.1']
  %s0 = inlined_call_operand.hbm [shape: f32[2,512], index: 0, kind: input, shape index: {}]
  %s1 = inlined_call_operand.vmem [shape: f32[1,512], index: 1, kind: input, shape index: {}]
  %s2 = inlined_call_operand.<no memory space> [shape: f32[1], index: 2, kind: input, shape index: {}]
  %s3 = inlined_call_operand.vmem [shape: f32[2,1], index: 3, kind: output, shape index: {}]
  %s4 = sld [smem:[#allocation0]]
  $region26: #{tpu_custom_call.1} parent=0
    _
  %s6 = ssub.s32 1, %s4
  %s7 = scalar_select 0, %s6, %s4
  %8 = sst [smem:[#allocation2]] %s2
  $region1: #{tpu_custom_call.1} parent=0
    #allocation3 [shape = 'u8[4096]{0}', space=vmem, size = 0x1000, scoped, tag = 'input window, operand 0, single buffered']
    #allocation4 [shape = 's32[1]{0}', space=sflag, size = 0x4, scoped, tag = 'scoped memory for tpu_custom_call.1']
    %9 = vsyncpa [#allocation4], 0
    // Predicated region
    $region2: #{tpu_custom_call.1} parent=1 // pred_check
      _
    $region3: #{tpu_custom_call.1} parent=1 // pred_check_branch
      %11 = sbr.rel (0) target = $region5
    $region4: #{tpu_custom_call.1} parent=1 // pred_region
      %s13 = ssub.s32 128, 128
      %14 = vsyncadd [#allocation4], %s13
      %s16 = sshll.u32 [#allocation3], 4
      %s17 = int_to_ptr.vmem [resolvable:$true] %s16
      %19 = dma.hbm_to_vmem [thread:$0]  %s0, 128, %s17, [#allocation4]
    $region5: #{tpu_custom_call.1} parent=1 // pred_fallthru
      _
    // Predicated region
    $region6: #{tpu_custom_call.1} parent=1 // pred_check
      _
    $region7: #{tpu_custom_call.1} parent=1 // pred_check_branch
      %21 = sbr.rel (0) target = $region9
    $region8: #{tpu_custom_call.1} parent=1 // pred_region
      _
    $region9: #{tpu_custom_call.1} parent=1 // pred_fallthru
      _
    // Predicated region
    $region10: #{tpu_custom_call.1} parent=1 // pred_check
      _
    $region11: #{tpu_custom_call.1} parent=1 // pred_check_branch
      %23 = sbr.rel (0) target = $region13
    $region12: #{tpu_custom_call.1} parent=1 // pred_region
      _
    $region13: #{tpu_custom_call.1} parent=1 // pred_fallthru
      _
    // Predicated region
    $region14: #{tpu_custom_call.1} parent=1 // pred_check
      _
    $region15: #{tpu_custom_call.1} parent=1 // pred_check_branch
      %25 = sbr.rel (0) target = $region17
    $region16: #{tpu_custom_call.1} parent=1 // pred_region
      %26 = dma.done [#allocation4], 128
    $region17: #{tpu_custom_call.1} parent=1 // pred_fallthru
      _
    %v27 = vld [vmem:[#allocation3] sm:$0xff]
    %v28 = vld [vmem:[%s1] sm:$0xf]
    %v30 = vlaneseq
    %v31 = vshrl.u32 %v30, 7
    %v32 = vsub.s32 0, %v31
    %v33 = vrot.slane %v28, %v32
    %v34 = vlaneseq
    %v35 = vshrl.u32 %v34, 7
    %v36 = vsub.s32 1, %v35
    %v37 = vrot.slane %v28, %v36
    %v38 = vlaneseq
    %v39 = vshrl.u32 %v38, 7
    %v40 = vsub.s32 2, %v39
    %v41 = vrot.slane %v28, %v40
    %v42 = vlaneseq
    %v43 = vshrl.u32 %v42, 7
    %v44 = vsub.s32 3, %v43
    %v45 = vrot.slane %v28, %v44
    %v46 = vcombine.low %v33, %v37
    %v47 = vcombine.low %v41, %v45
    %v49 = vunpack.c.l.s4 1983009808
    %v50 = vunpack.c.0.s8 %v49
    %v51 = vlaneseq
    %v52 = vshrl.u32 %v51, 7
    %v53 = vsub.s32 %v50, %v52
    %v54 = vrot.slane %v46, %v53
    %v56 = vunpack.c.l.s4 1983009808
    %v57 = vunpack.c.0.s8 %v56
    %v58 = vlaneseq
    %v59 = vshrl.u32 %v58, 7
    %v60 = vsub.s32 %v57, %v59
    %v61 = vrot.slane %v47, %v60
    %v62 = vcombine.low %v54, %v61
    %v64 = vmul.f32 %v27, %v62
    %v66 = vrot.slane %v64, 2
    %v68 = vadd.f32 %v64, %v66
    %v69 = vrot.slane %v64, 4
    %v71 = vadd.f32 %v68, %v69
    %v72 = vrot.slane %v64, 6
    %v74 = vadd.f32 %v71, %v72
    %vm75 = vcmask 1041408
    %v76 = vsel %vm75, %v74, 0.0
    %77 = vadd.xlane.f32.xlu0 %v76
    %v78 = vpop.xlane.xlu0 %77
    %s79 = sld [smem:[#allocation2]]
    %v80 = vstv %s79
    %v81 = vadd.f32 %v78, %v80
    %vm82 = vcmask 1024
    %83 = vst.msk [vmem:[%s3] sm:$0x3] %vm82, %v81
    // Predicated region
    $region18: #{tpu_custom_call.1} parent=1 // pred_check
      _
    $region19: #{tpu_custom_call.1} parent=1 // pred_check_branch
      %85 = sbr.rel (0) target = $region21
    $region20: #{tpu_custom_call.1} parent=1 // pred_region
      _
    $region21: #{tpu_custom_call.1} parent=1 // pred_fallthru
      _
    // Predicated region
    $region22: #{tpu_custom_call.1} parent=1 // pred_check
      _
    $region23: #{tpu_custom_call.1} parent=1 // pred_check_branch
      %87 = sbr.rel (0) target = $region25
    $region24: #{tpu_custom_call.1} parent=1 // pred_region
      _
    $region25: #{tpu_custom_call.1} parent=1 // pred_fallthru
      _
    %88 = vsyncpa [#allocation4], 1

</llo_original>
